<compile_context>
chip_gen: v7x
topology: tpu7x:2x2x1
jax: 0.10.0
libtpu: 0.0.40
codegen_flags: <defaults>
</compile_context>

<pallas_src>
import functools

import jax
import jax.numpy as jnp
from jax.experimental import pallas as pl
from jax.experimental.pallas import tpu as pltpu


def _round_up(x: int, m: int) -> int:
    return ((x + m - 1) // m) * m


def _agent_kernel(x_ref, w1_ref, b1_ref, w2_ref, b2_ref, w3_ref, b3_ref, out_ref):
    # x: [TM, 14] f32 -> bf16 (in-kernel cast; avoids a separate wrapper-side HBM pass)
    x = x_ref[...].astype(jnp.bfloat16)

    # layer1: [TM,14] @ [14,256] (bf16 MXU, f32 acc) + [1,256] -> ReLU
    h1 = jnp.dot(x, w1_ref[...], preferred_element_type=jnp.float32) + b1_ref[...]
    h1 = jnp.maximum(h1, 0.0).astype(jnp.bfloat16)

    # layer2: [TM,256] @ [256,128] + [1,128] -> ReLU
    h2 = jnp.dot(h1, w2_ref[...], preferred_element_type=jnp.float32) + b2_ref[...]
    h2 = jnp.maximum(h2, 0.0).astype(jnp.bfloat16)

    # final: [TM,128] @ [128,4] + [1,4]  -> narrow (TM,4) store (16 B/row instead of 512 B/row)
    out_ref[...] = jnp.dot(h2, w3_ref[...], preferred_element_type=jnp.float32) + b3_ref[...]


def _prepare_params(params):
    """Cast raw [in,out] f32 params into the kernel's layout (bf16 weights, f32 row biases)."""
    w1, b1, w2, b2, w3, b3 = params
    return (
        w1.astype(jnp.bfloat16),                      # (14, 256)  -- natural K, no pad
        b1.reshape(1, 256).astype(jnp.float32),
        w2.astype(jnp.bfloat16),                      # (256, 128)
        b2.reshape(1, 128).astype(jnp.float32),
        w3.astype(jnp.bfloat16),                      # (128, 4)   -- natural N, no pad
        b3.reshape(1, 4).astype(jnp.float32),
    )


def _choose_tile(batch: int, tm_max: int) -> int:
    """Row tile: multiple of 16 (bf16 sublanes), <= tm_max, ~half the batch so that
    mid-size batches yield >= 2 balanced grid steps (both v7x TensorCores get work)."""
    half = -(-batch // 2)                             # cdiv(batch, 2)
    return min(tm_max, _round_up(max(half, 16), 16))


@functools.partial(jax.jit, static_argnames=("tm_max",))
def simple_agent_forward(x, params, *, tm_max=2048):
    """x: [batch, 14] (or [batch, ...] flattening to 14) float32. Returns [batch, 4] f32."""
    x = x.reshape(x.shape[0], -1).astype(jnp.float32)   # nn.Flatten
    batch, feat = x.shape
    assert feat == 14, f"expected 14 input features, got {feat}"

    w1p, b1p, w2p, b2p, w3p, b3p = _prepare_params(params)

    tm = _choose_tile(batch, tm_max)
    b_pad = _round_up(batch, tm)
    grid = (b_pad // tm,)
    if b_pad != batch:
        # Cheap: only 14 columns; padded rows are explicit zeros so they can't affect outputs.
        x = jnp.pad(x, ((0, b_pad - batch), (0, 0)))

    # Only needed if someone pushes tm past 2048 (v5e scoped-VMEM default is 16 MiB).
    vmem_limit = 48 * 1024 * 1024 if tm > 2048 else None

    const = lambda i: (0, 0)  # weights / biases: resident in VMEM across all grid steps
    out = pl.pallas_call(
        _agent_kernel,
        out_shape=jax.ShapeDtypeStruct((b_pad, 4), jnp.float32),
        grid=grid,
        in_specs=[
            pl.BlockSpec((tm, 14), lambda i: (i, 0)),    # x tile (pipelined), natural width
            pl.BlockSpec((14, 256), const),              # w1
            pl.BlockSpec((1, 256), const),               # b1
            pl.BlockSpec((256, 128), const),             # w2
            pl.BlockSpec((1, 128), const),               # b2
            pl.BlockSpec((128, 4), const),               # w3 (natural 4 output lanes)
            pl.BlockSpec((1, 4), const),                 # b3
        ],
        out_specs=pl.BlockSpec((tm, 4), lambda i: (i, 0)),
        compiler_params=pltpu.CompilerParams(
            dimension_semantics=("parallel",),           # shard batch across TCs on v7x
            vmem_limit_bytes=vmem_limit,
        ),
    )(x, w1p, b1p, w2p, b2p, w3p, b3p)

    return out[:batch] if b_pad != batch else out


def init_params(key):
    """nn.Linear-style init (uniform +/- 1/sqrt(fan_in)); weights stored as [in, out]."""
    dims = [(14, 256), (256, 128), (128, 4)]
    params = []
    for fan_in, fan_out in dims:
        key, kw, kb = jax.random.split(key, 3)
        bound = 1.0 / jnp.sqrt(float(fan_in))
        w = jax.random.uniform(kw, (fan_in, fan_out), jnp.float32, -bound, bound)
        b = jax.random.uniform(kb, (fan_out,), jnp.float32, -bound, bound)
        params.extend([w, b])
    return tuple(params)


def _reference(x, params):
    """Plain-JAX reference mimicking the kernel's bf16-weight / f32-accumulate math."""
    w1, b1, w2, b2, w3, b3 = params
    r = lambda a: a.astype(jnp.bfloat16).astype(jnp.float32)  # bf16 rounding
    h = jnp.maximum(r(x) @ r(w1) + b1, 0.0)
    h = jnp.maximum(r(h) @ r(w2) + b2, 0.0)
    return r(h) @ r(w3) + b3


if __name__ == "__main__":
    key = jax.random.PRNGKey(0)
    pkey, xkey, xkey2 = jax.random.split(key, 3)

    params = init_params(pkey)

    # Module input: batch of 14-dim state vectors (nn.Flatten is a no-op for 2-D input).
    batch = 8
    x = jax.random.normal(xkey, (batch, 14), dtype=jnp.float32)

    out = simple_agent_forward(x, params)
    jax.block_until_ready(out)
    assert out.shape == (batch, 4)
    ref = _reference(x, params)
    assert jnp.allclose(out, ref, atol=2e-3, rtol=2e-3), (
        f"max abs err {jnp.max(jnp.abs(out - ref))}")
    # Sanity vs. full-f32 PyTorch-equivalent forward (loose tol for bf16 weights).
    w1, b1, w2, b2, w3, b3 = params
    ref_f32 = jnp.maximum(jnp.maximum(x @ w1 + b1, 0.0) @ w2 + b2, 0.0) @ w3 + b3
    assert jnp.allclose(out, ref_f32, atol=3e-2, rtol=3e-2)

    # Second check: ragged batch with a multi-step grid (tm_max=16 -> tm=16, batch 37 -> 48, grid=3).
    x2 = jax.random.normal(xkey2, (37, 14), dtype=jnp.float32)
    out2 = simple_agent_forward(x2, params, tm_max=16)
    jax.block_until_ready(out2)
    assert out2.shape == (37, 4)
    assert jnp.allclose(out2, _reference(x2, params), atol=2e-3, rtol=2e-3)

    print("KERNEL_OK")
</pallas_src>

<mosaic_0001>
module attributes {stable_mosaic.version = 11 : i64} {
  func.func @_agent_kernel(%arg0: i32, %arg1: memref<16x14xf32, #tpu.memory_space<vmem>>, %arg2: memref<14x256xbf16, #tpu.memory_space<vmem>>, %arg3: memref<1x256xf32, #tpu.memory_space<vmem>>, %arg4: memref<256x128xbf16, #tpu.memory_space<vmem>>, %arg5: memref<1x128xf32, #tpu.memory_space<vmem>>, %arg6: memref<128x4xbf16, #tpu.memory_space<vmem>>, %arg7: memref<1x4xf32, #tpu.memory_space<vmem>>, %arg8: memref<16x4xf32, #tpu.memory_space<vmem>>) attributes {dimension_semantics = [#tpu.dimension_semantics<parallel>], iteration_bounds = array<i64: 1>, scalar_prefetch = 0 : i64, scratch_operands = 0 : i64, tpu.core_type = #tpu.core_type<tc>, window_params = [{transform_indices = @transform_0, window_bounds = array<i64: 16, 14>}, {pipeline_mode = #tpu.pipeline_mode<synchronous>, transform_indices = @transform_1, window_bounds = array<i64: 14, 256>}, {pipeline_mode = #tpu.pipeline_mode<synchronous>, transform_indices = @transform_2, window_bounds = array<i64: 1, 256>}, {pipeline_mode = #tpu.pipeline_mode<synchronous>, transform_indices = @transform_3, window_bounds = array<i64: 256, 128>}, {pipeline_mode = #tpu.pipeline_mode<synchronous>, transform_indices = @transform_4, window_bounds = array<i64: 1, 128>}, {pipeline_mode = #tpu.pipeline_mode<synchronous>, transform_indices = @transform_5, window_bounds = array<i64: 128, 4>}, {pipeline_mode = #tpu.pipeline_mode<synchronous>, transform_indices = @transform_6, window_bounds = array<i64: 1, 4>}, {transform_indices = @transform_7, window_bounds = array<i64: 16, 4>}]} {
    %c0 = arith.constant 0 : index
    %c0_0 = arith.constant 0 : index
    %0 = vector.load %arg1[%c0, %c0_0] : memref<16x14xf32, #tpu.memory_space<vmem>>, vector<16x14xf32>
    %1 = arith.truncf %0 : vector<16x14xf32> to vector<16x14xbf16>
    %c0_1 = arith.constant 0 : index
    %c0_2 = arith.constant 0 : index
    %2 = vector.load %arg2[%c0_1, %c0_2] : memref<14x256xbf16, #tpu.memory_space<vmem>>, vector<14x256xbf16>
    %cst = arith.constant dense<0.000000e+00> : vector<16x256xf32>
    %3 = tpu.matmul %1, %2, %cst {dimension_numbers = #tpu.dot_dimension_numbers<[1], [0], [0], [1], [0, 0, 1, 1], [], []>} : vector<16x14xbf16>, vector<14x256xbf16>, vector<16x256xf32> -> vector<16x256xf32>
    %c0_3 = arith.constant 0 : index
    %c0_4 = arith.constant 0 : index
    %4 = vector.load %arg3[%c0_3, %c0_4] : memref<1x256xf32, #tpu.memory_space<vmem>>, vector<1x256xf32>
    %5 = vector.broadcast %4 : vector<1x256xf32> to vector<16x256xf32>
    %6 = arith.addf %3, %5 : vector<16x256xf32>
    %cst_5 = arith.constant 0.000000e+00 : f32
    %7 = vector.broadcast %cst_5 : f32 to vector<16x256xf32>
    %8 = arith.maximumf %6, %7 : vector<16x256xf32>
    %9 = arith.truncf %8 : vector<16x256xf32> to vector<16x256xbf16>
    %c0_6 = arith.constant 0 : index
    %c0_7 = arith.constant 0 : index
    %10 = vector.load %arg4[%c0_6, %c0_7] : memref<256x128xbf16, #tpu.memory_space<vmem>>, vector<256x128xbf16>
    %cst_8 = arith.constant dense<0.000000e+00> : vector<16x128xf32>
    %11 = tpu.matmul %9, %10, %cst_8 {dimension_numbers = #tpu.dot_dimension_numbers<[1], [0], [0], [1], [0, 0, 1, 1], [], []>} : vector<16x256xbf16>, vector<256x128xbf16>, vector<16x128xf32> -> vector<16x128xf32>
    %c0_9 = arith.constant 0 : index
    %c0_10 = arith.constant 0 : index
    %12 = vector.load %arg5[%c0_9, %c0_10] : memref<1x128xf32, #tpu.memory_space<vmem>>, vector<1x128xf32>
    %13 = vector.broadcast %12 : vector<1x128xf32> to vector<16x128xf32>
    %14 = arith.addf %11, %13 : vector<16x128xf32>
    %cst_11 = arith.constant 0.000000e+00 : f32
    %15 = vector.broadcast %cst_11 : f32 to vector<16x128xf32>
    %16 = arith.maximumf %14, %15 : vector<16x128xf32>
    %17 = arith.truncf %16 : vector<16x128xf32> to vector<16x128xbf16>
    %c0_12 = arith.constant 0 : index
    %c0_13 = arith.constant 0 : index
    %18 = vector.load %arg6[%c0_12, %c0_13] : memref<128x4xbf16, #tpu.memory_space<vmem>>, vector<128x4xbf16>
    %cst_14 = arith.constant dense<0.000000e+00> : vector<16x4xf32>
    %19 = tpu.matmul %17, %18, %cst_14 {dimension_numbers = #tpu.dot_dimension_numbers<[1], [0], [0], [1], [0, 0, 1, 1], [], []>} : vector<16x128xbf16>, vector<128x4xbf16>, vector<16x4xf32> -> vector<16x4xf32>
    %c0_15 = arith.constant 0 : index
    %c0_16 = arith.constant 0 : index
    %20 = vector.load %arg7[%c0_15, %c0_16] : memref<1x4xf32, #tpu.memory_space<vmem>>, vector<1x4xf32>
    %21 = vector.broadcast %20 : vector<1x4xf32> to vector<16x4xf32>
    %22 = arith.addf %19, %21 : vector<16x4xf32>
    %c0_17 = arith.constant 0 : index
    %c0_18 = arith.constant 0 : index
    %23 = vector.load %arg8[%c0_17, %c0_18] : memref<16x4xf32, #tpu.memory_space<vmem>>, vector<16x4xf32>
    tpu.vector_store %arg8[%c0_17, %c0_18], %22 {strides = array<i32>} : memref<16x4xf32, #tpu.memory_space<vmem>>, vector<16x4xf32>,
    return
  }
  func.func @transform_0(%arg0: i32) -> (i32, i32) {
    %c0_i32 = arith.constant 0 : i32
    %c0_i32_0 = arith.constant 0 : i32
    return %arg0, %c0_i32 : i32, i32
  }
  func.func @transform_1(%arg0: i32) -> (i32, i32) {
    %c0_i32 = arith.constant 0 : i32
    %c0_i32_0 = arith.constant 0 : i32
    %c0_i32_1 = arith.constant 0 : i32
    return %c0_i32, %c0_i32_0 : i32, i32
  }
  func.func @transform_2(%arg0: i32) -> (i32, i32) {
    %c0_i32 = arith.constant 0 : i32
    %c0_i32_0 = arith.constant 0 : i32
    %c0_i32_1 = arith.constant 0 : i32
    return %c0_i32, %c0_i32_0 : i32, i32
  }
  func.func @transform_3(%arg0: i32) -> (i32, i32) {
    %c0_i32 = arith.constant 0 : i32
    %c0_i32_0 = arith.constant 0 : i32
    %c0_i32_1 = arith.constant 0 : i32
    return %c0_i32, %c0_i32_0 : i32, i32
  }
  func.func @transform_4(%arg0: i32) -> (i32, i32) {
    %c0_i32 = arith.constant 0 : i32
    %c0_i32_0 = arith.constant 0 : i32
    %c0_i32_1 = arith.constant 0 : i32
    return %c0_i32, %c0_i32_0 : i32, i32
  }
  func.func @transform_5(%arg0: i32) -> (i32, i32) {
    %c0_i32 = arith.constant 0 : i32
    %c0_i32_0 = arith.constant 0 : i32
    %c0_i32_1 = arith.constant 0 : i32
    return %c0_i32, %c0_i32_0 : i32, i32
  }
  func.func @transform_6(%arg0: i32) -> (i32, i32) {
    %c0_i32 = arith.constant 0 : i32
    %c0_i32_0 = arith.constant 0 : i32
    %c0_i32_1 = arith.constant 0 : i32
    return %c0_i32, %c0_i32_0 : i32, i32
  }
  func.func @transform_7(%arg0: i32) -> (i32, i32) {
    %c0_i32 = arith.constant 0 : i32
    %c0_i32_0 = arith.constant 0 : i32
    return %arg0, %c0_i32 : i32, i32
  }
}

</mosaic_0001>

<llo_original>
// kernel: simple_agent_forward.1
$region0: #{simple_agent_forward.1}
  #allocation0 [shape = 'u32[]', space=smem, size = 0x4, offset = 0x4, fixed_abs, tag = 'smem constant byte address 0x4 - core index']
  #allocation1 [shape = 'u32[144,128]{1,0:T(1,128)}', space=vmem, size = 0x12000, scoped, tag = 'internal scratch']
  %s0 = inlined_call_operand.vmem [shape: f32[16,14], index: 0, kind: input, shape index: {}]
  %s1 = inlined_call_operand.vmem [shape: bf16[14,256], index: 1, kind: input, shape index: {}]
  %s2 = inlined_call_operand.vmem [shape: f32[1,256], index: 2, kind: input, shape index: {}]
  %s3 = inlined_call_operand.vmem [shape: bf16[256,128], index: 3, kind: input, shape index: {}]
  %s4 = inlined_call_operand.vmem [shape: f32[1,128], index: 4, kind: input, shape index: {}]
  %s5 = inlined_call_operand.vmem [shape: bf16[128,4], index: 5, kind: input, shape index: {}]
  %s6 = inlined_call_operand.vmem [shape: f32[1,4], index: 6, kind: input, shape index: {}]
  %s7 = inlined_call_operand.vmem [shape: f32[16,4], index: 7, kind: output, shape index: {}]
  %s8 = sld [smem:[#allocation0]]
  $region38: #{simple_agent_forward.1} parent=0
    _
  %s10 = ssub.s32 1, %s8
  %s11 = scalar_select 0, %s10, %s8
  // Predicated region
  $region2: #{simple_agent_forward.1} parent=0 // pred_check
    _
  $region3: #{simple_agent_forward.1} parent=0 // pred_check_branch
    %13 = sbr.rel (0) target = $region5
  $region4: #{simple_agent_forward.1} parent=0 // pred_region
    _
  $region5: #{simple_agent_forward.1} parent=0 // pred_fallthru
    _
  // Predicated region
  $region6: #{simple_agent_forward.1} parent=0 // pred_check
    _
  $region7: #{simple_agent_forward.1} parent=0 // pred_check_branch
    %15 = sbr.rel (0) target = $region9
  $region8: #{simple_agent_forward.1} parent=0 // pred_region
    _
  $region9: #{simple_agent_forward.1} parent=0 // pred_fallthru
    _
  // Predicated region
  $region10: #{simple_agent_forward.1} parent=0 // pred_check
    _
  $region11: #{simple_agent_forward.1} parent=0 // pred_check_branch
    %17 = sbr.rel (0) target = $region13
  $region12: #{simple_agent_forward.1} parent=0 // pred_region
    _
  $region13: #{simple_agent_forward.1} parent=0 // pred_fallthru
    _
  // Predicated region
  $region14: #{simple_agent_forward.1} parent=0 // pred_check
    _
  $region15: #{simple_agent_forward.1} parent=0 // pred_check_branch
    %19 = sbr.rel (0) target = $region17
  $region16: #{simple_agent_forward.1} parent=0 // pred_region
    _
  $region17: #{simple_agent_forward.1} parent=0 // pred_fallthru
    _
  // Predicated region
  $region18: #{simple_agent_forward.1} parent=0 // pred_check
    _
  $region19: #{simple_agent_forward.1} parent=0 // pred_check_branch
    %21 = sbr.rel (0) target = $region21
  $region20: #{simple_agent_forward.1} parent=0 // pred_region
    _
  $region21: #{simple_agent_forward.1} parent=0 // pred_fallthru
    _
  // Predicated region
  $region22: #{simple_agent_forward.1} parent=0 // pred_check
    _
  $region23: #{simple_agent_forward.1} parent=0 // pred_check_branch
    %23 = sbr.rel (0) target = $region25
  $region24: #{simple_agent_forward.1} parent=0 // pred_region
    _
  $region25: #{simple_agent_forward.1} parent=0 // pred_fallthru
    _
  // Predicated region
  $region26: #{simple_agent_forward.1} parent=0 // pred_check
    _
  $region27: #{simple_agent_forward.1} parent=0 // pred_check_branch
    %25 = sbr.rel (0) target = $region29
  $region28: #{simple_agent_forward.1} parent=0 // pred_region
    _
  $region29: #{simple_agent_forward.1} parent=0 // pred_fallthru
    _
  %v27 = vld [vmem:[%s0] sm:$0xff]
  %v28 = vld [vmem:[%s0 + $0x8] sm:$0xff]
  %v29 = vpack.c.bf16 %v28, %v27
  %v30 = vld [vmem:[%s1] sm:$0xff]
  %v31 = vld [vmem:[%s1 + $0x8] sm:$0x77]
  %v32 = vld [vmem:[%s2] sm:$0x3]
  %v34 = vlaneseq
  %v35 = vshrl.u32 %v34, 7
  %v36 = vsub.s32 0, %v35
  %v37 = vrot.slane %v32, %v36
  %v38 = vlaneseq
  %v39 = vshrl.u32 %v38, 7
  %v40 = vsub.s32 1, %v39
  %v41 = vrot.slane %v32, %v40
  %v46 = vunpack.c.l.b16 %v30
  %v47 = vunpack.c.h.b16 %v30
  %v48 = vunpack.c.l.b16 %v31
  %v49 = vunpack.c.h.b16 %v31
  %v50 = vpack.c.b16 %v48, %v46
  %v51 = vpack.c.b16 %v49, %v47
  %vm52 = vcmask 113664
  %v54 = vsel %vm52, %v29, 0
  %vm56 = vcmask 1046528
  %v58 = vsel %vm56, %v50, 0
  %v61 = vsel %vm56, %v51, 0
  %63 = vmatprep.subr.bf16.mxu0 %v61
  %64 = vmatpush1.bf16.msra.mxu0 %v58
  %65 = vmatprep.subr.bf16.mxu0 0
  %66 = vmatpush1.bf16.msra.mxu0 0
  %67 = vmatprep.subr.bf16.mxu0 0
  %68 = vmatpush1.bf16.msra.mxu0 0
  %69 = vmatprep.subr.bf16.mxu0 0
  %70 = vmatpush1.bf16.msra.mxu0 0
  %71 = vmatprep.subr.bf16.mxu0 0
  %72 = vmatpush1.bf16.msra.mxu0 0
  %73 = vmatprep.subr.bf16.mxu0 0
  %74 = vmatpush1.bf16.msra.mxu0 0
  %75 = vmatprep.subr.bf16.mxu0 0
  %76 = vmatpush1.bf16.msra.mxu0 0
  %77 = vmatprep.subr.bf16.mxu0 0
  %78 = vmatpush1.bf16.msra.mxu0 0
  %79 = vmatprep.subr.bf16.mxu0 0
  %80 = vmatpush1.bf16.msra.mxu0 0
  %81 = vmatprep.subr.bf16.mxu0 0
  %82 = vmatpush1.bf16.msra.mxu0 0
  %83 = vmatprep.subr.bf16.mxu0 0
  %84 = vmatpush1.bf16.msra.mxu0 0
  %85 = vmatprep.subr.bf16.mxu0 0
  %86 = vmatpush1.bf16.msra.mxu0 0
  %87 = vmatprep.subr.bf16.mxu0 0
  %88 = vmatpush1.bf16.msra.mxu0 0
  %89 = vmatprep.subr.bf16.mxu0 0
  %90 = vmatpush1.bf16.msra.mxu0 0
  %91 = vmatprep.subr.bf16.mxu0 0
  %92 = vmatpush1.bf16.msra.mxu0 0
  %93 = vmatprep.subr.bf16.mxu0 0
  %94 = vmatpush1.bf16.msra.mxu0 0
  %95 = vmatprep.mubr.bf16.mxu0 0
  %96 = vmatmul.mubr.bf16.gmra.mrb[0].mxu0 %v54
  %v97 = vpop.f32.mrb[0].mxu0
  %v98 = vadd.f32 %v37, %v97
  %v99 = vpop.f32.mrb[0].mxu0
  %v100 = vadd.f32 %v41, %v99
  %v101 = vpop.f32.mrb[0].mxu0
  %v102 = vadd.f32 %v37, %v101
  %v103 = vpop.f32.mrb[0].mxu0
  %v104 = vadd.f32 %v41, %v103
  %105 = vdwg.mxu0
  %v106 = vmax.f32 %v98, 0.0
  %v107 = vmax.f32 %v100, 0.0
  %v108 = vmax.f32 %v102, 0.0
  %v109 = vmax.f32 %v104, 0.0
  %v110 = vpack.c.bf16 %v108, %v106
  %v111 = vpack.c.bf16 %v109, %v107
  %v112 = vld [vmem:[%s3] sm:$0xf]
  %v113 = vld [vmem:[%s3 + $0x4] sm:$0xf]
  %v114 = vld [vmem:[%s3 + $0x8] sm:$0xf]
  %v115 = vld [vmem:[%s3 + $0xc] sm:$0xf]
  %v116 = vld [vmem:[%s3 + $0x10] sm:$0xf]
  %v117 = vld [vmem:[%s3 + $0x14] sm:$0xf]
  %v118 = vld [vmem:[%s3 + $0x18] sm:$0xf]
  %v119 = vld [vmem:[%s3 + $0x1c] sm:$0xf]
  %v120 = vld [vmem:[%s3 + $0x20] sm:$0xf]
  %v121 = vld [vmem:[%s3 + $0x24] sm:$0xf]
  %v122 = vld [vmem:[%s3 + $0x28] sm:$0xf]
  %v123 = vld [vmem:[%s3 + $0x2c] sm:$0xf]
  %v124 = vld [vmem:[%s3 + $0x30] sm:$0xf]
  %v125 = vld [vmem:[%s3 + $0x34] sm:$0xf]
  %v126 = vld [vmem:[%s3 + $0x38] sm:$0xf]
  %v127 = vld [vmem:[%s3 + $0x3c] sm:$0xf]
  %v128 = vld [vmem:[%s3 + $0x40] sm:$0xf]
  %v129 = vld [vmem:[%s3 + $0x44] sm:$0xf]
  %v130 = vld [vmem:[%s3 + $0x48] sm:$0xf]
  %v131 = vld [vmem:[%s3 + $0x4c] sm:$0xf]
  %v132 = vld [vmem:[%s3 + $0x50] sm:$0xf]
  %v133 = vld [vmem:[%s3 + $0x54] sm:$0xf]
  %v134 = vld [vmem:[%s3 + $0x58] sm:$0xf]
  %v135 = vld [vmem:[%s3 + $0x5c] sm:$0xf]
  %v136 = vld [vmem:[%s3 + $0x60] sm:$0xf]
  %v137 = vld [vmem:[%s3 + $0x64] sm:$0xf]
  %v138 = vld [vmem:[%s3 + $0x68] sm:$0xf]
  %v139 = vld [vmem:[%s3 + $0x6c] sm:$0xf]
  %v140 = vld [vmem:[%s3 + $0x70] sm:$0xf]
  %v141 = vld [vmem:[%s3 + $0x74] sm:$0xf]
  %v142 = vld [vmem:[%s3 + $0x78] sm:$0xf]
  %v143 = vld [vmem:[%s3 + $0x7c] sm:$0xf]
  %v144 = vld [vmem:[%s4] sm:$0x1]
  %v146 = vlaneseq
  %v147 = vshrl.u32 %v146, 7
  %v148 = vsub.s32 0, %v147
  %v149 = vrot.slane %v144, %v148
  %v183 = vunpack.c.l.b16 %v112
  %v184 = vunpack.c.l.b16 %v113
  %v185 = vunpack.c.l.b16 %v114
  %v186 = vunpack.c.l.b16 %v115
  %v187 = vunpack.c.l.b16 %v116
  %v188 = vunpack.c.l.b16 %v117
  %v189 = vunpack.c.l.b16 %v118
  %v190 = vunpack.c.l.b16 %v119
  %v191 = vunpack.c.l.b16 %v120
  %v192 = vunpack.c.l.b16 %v121
  %v193 = vunpack.c.l.b16 %v122
  %v194 = vunpack.c.l.b16 %v123
  %v195 = vunpack.c.l.b16 %v124
  %v196 = vunpack.c.l.b16 %v125
  %v197 = vunpack.c.l.b16 %v126
  %v198 = vunpack.c.l.b16 %v127
  %v199 = vunpack.c.l.b16 %v128
  %v200 = vunpack.c.l.b16 %v129
  %v201 = vunpack.c.l.b16 %v130
  %v202 = vunpack.c.l.b16 %v131
  %v203 = vunpack.c.l.b16 %v132
  %v204 = vunpack.c.l.b16 %v133
  %v205 = vunpack.c.l.b16 %v134
  %v206 = vunpack.c.l.b16 %v135
  %v207 = vunpack.c.l.b16 %v136
  %v208 = vunpack.c.l.b16 %v137
  %v209 = vunpack.c.l.b16 %v138
  %v210 = vunpack.c.l.b16 %v139
  %v211 = vunpack.c.l.b16 %v140
  %v212 = vunpack.c.l.b16 %v141
  %v213 = vunpack.c.l.b16 %v142
  %v214 = vunpack.c.l.b16 %v143
  %v215 = vpack.c.b16 %v184, %v183
  %v216 = vpack.c.b16 %v186, %v185
  %v217 = vpack.c.b16 %v188, %v187
  %v218 = vpack.c.b16 %v190, %v189
  %v219 = vpack.c.b16 %v192, %v191
  %v220 = vpack.c.b16 %v194, %v193
  %v221 = vpack.c.b16 %v196, %v195
  %v222 = vpack.c.b16 %v198, %v197
  %v223 = vpack.c.b16 %v200, %v199
  %v224 = vpack.c.b16 %v202, %v201
  %v225 = vpack.c.b16 %v204, %v203
  %v226 = vpack.c.b16 %v206, %v205
  %v227 = vpack.c.b16 %v208, %v207
  %v228 = vpack.c.b16 %v210, %v209
  %v229 = vpack.c.b16 %v212, %v211
  %v230 = vpack.c.b16 %v214, %v213
  %247 = vmatprep.subr.bf16.mxu0 0
  %248 = vmatpush1.bf16.msra.mxu0 %v215
  %249 = vmatprep.subr.bf16.mxu0 0
  %250 = vmatpush1.bf16.msra.mxu0 %v216
  %251 = vmatprep.subr.bf16.mxu0 0
  %252 = vmatpush1.bf16.msra.mxu0 %v217
  %253 = vmatprep.subr.bf16.mxu0 0
  %254 = vmatpush1.bf16.msra.mxu0 %v218
  %255 = vmatprep.subr.bf16.mxu0 0
  %256 = vmatpush1.bf16.msra.mxu0 %v219
  %257 = vmatprep.subr.bf16.mxu0 0
  %258 = vmatpush1.bf16.msra.mxu0 %v220
  %259 = vmatprep.subr.bf16.mxu0 0
  %260 = vmatpush1.bf16.msra.mxu0 %v221
  %261 = vmatprep.subr.bf16.mxu0 0
  %262 = vmatpush1.bf16.msra.mxu0 %v222
  %263 = vmatprep.subr.bf16.mxu0 0
  %264 = vmatpush1.bf16.msra.mxu0 %v223
  %265 = vmatprep.subr.bf16.mxu0 0
  %266 = vmatpush1.bf16.msra.mxu0 %v224
  %267 = vmatprep.subr.bf16.mxu0 0
  %268 = vmatpush1.bf16.msra.mxu0 %v225
  %269 = vmatprep.subr.bf16.mxu0 0
  %270 = vmatpush1.bf16.msra.mxu0 %v226
  %271 = vmatprep.subr.bf16.mxu0 0
  %272 = vmatpush1.bf16.msra.mxu0 %v227
  %273 = vmatprep.subr.bf16.mxu0 0
  %274 = vmatpush1.bf16.msra.mxu0 %v228
  %275 = vmatprep.subr.bf16.mxu0 0
  %276 = vmatpush1.bf16.msra.mxu0 %v229
  %277 = vmatprep.subr.bf16.mxu0 0
  %278 = vmatpush1.bf16.msra.mxu0 %v230
  %279 = vmatprep.mubr.bf16.mxu0 %v111
  %280 = vmatmul.mubr.bf16.gmra.mrb[0].mxu0 %v110
  %v281 = vpop.f32.mrb[0].mxu0
  %v282 = vadd.f32 %v149, %v281
  %v283 = vpop.f32.mrb[0].mxu0
  %v284 = vpop.f32.mrb[0].mxu0
  %v285 = vadd.f32 %v149, %v284
  %v286 = vpop.f32.mrb[0].mxu0
  %287 = vdwg.mxu0
  %v288 = vmax.f32 %v282, 0.0
  %v289 = vmax.f32 %v285, 0.0
  %v290 = vpack.c.bf16 %v289, %v288
  %v291 = vld [vmem:[%s5] sm:$0xf]
  %v292 = vld [vmem:[%s5 + $0x4] sm:$0xf]
  %v293 = vld [vmem:[%s5 + $0x8] sm:$0xf]
  %v294 = vld [vmem:[%s5 + $0xc] sm:$0xf]
  %v295 = vld [vmem:[%s5 + $0x10] sm:$0xf]
  %v296 = vld [vmem:[%s5 + $0x14] sm:$0xf]
  %v297 = vld [vmem:[%s5 + $0x18] sm:$0xf]
  %v298 = vld [vmem:[%s5 + $0x1c] sm:$0xf]
  %v299 = vld [vmem:[%s5 + $0x20] sm:$0xf]
  %v300 = vld [vmem:[%s5 + $0x24] sm:$0xf]
  %v301 = vld [vmem:[%s5 + $0x28] sm:$0xf]
  %v302 = vld [vmem:[%s5 + $0x2c] sm:$0xf]
  %v303 = vld [vmem:[%s5 + $0x30] sm:$0xf]
  %v304 = vld [vmem:[%s5 + $0x34] sm:$0xf]
  %v305 = vld [vmem:[%s5 + $0x38] sm:$0xf]
  %v306 = vld [vmem:[%s5 + $0x3c] sm:$0xf]
  %v307 = vld [vmem:[%s6] sm:$0x1]
  %v309 = vlaneseq
  %v310 = vshrl.u32 %v309, 7
  %v311 = vsub.s32 0, %v310
  %v312 = vrot.slane %v307, %v311
  %v330 = vunpack.c.l.b16 %v291
  %v331 = vunpack.c.l.b16 %v292
  %v332 = vunpack.c.l.b16 %v293
  %v333 = vunpack.c.l.b16 %v294
  %v334 = vunpack.c.l.b16 %v295
  %v335 = vunpack.c.l.b16 %v296
  %v336 = vunpack.c.l.b16 %v297
  %v337 = vunpack.c.l.b16 %v298
  %v338 = vunpack.c.l.b16 %v299
  %v339 = vunpack.c.l.b16 %v300
  %v340 = vunpack.c.l.b16 %v301
  %v341 = vunpack.c.l.b16 %v302
  %v342 = vunpack.c.l.b16 %v303
  %v343 = vunpack.c.l.b16 %v304
  %v344 = vunpack.c.l.b16 %v305
  %v345 = vunpack.c.l.b16 %v306
  %v346 = vpack.c.b16 %v331, %v330
  %v347 = vpack.c.b16 %v333, %v332
  %v348 = vpack.c.b16 %v335, %v334
  %v349 = vpack.c.b16 %v337, %v336
  %v350 = vpack.c.b16 %v339, %v338
  %v351 = vpack.c.b16 %v341, %v340
  %v352 = vpack.c.b16 %v343, %v342
  %v353 = vpack.c.b16 %v345, %v344
  %362 = vmatprep.subr.bf16.mxu0 0
  %363 = vmatpush1.bf16.msra.mxu0 %v346
  %364 = vmatprep.subr.bf16.mxu0 0
  %365 = vmatpush1.bf16.msra.mxu0 %v347
  %366 = vmatprep.subr.bf16.mxu0 0
  %367 = vmatpush1.bf16.msra.mxu0 %v348
  %368 = vmatprep.subr.bf16.mxu0 0
  %369 = vmatpush1.bf16.msra.mxu0 %v349
  %370 = vmatprep.subr.bf16.mxu0 0
  %371 = vmatpush1.bf16.msra.mxu0 %v350
  %372 = vmatprep.subr.bf16.mxu0 0
  %373 = vmatpush1.bf16.msra.mxu0 %v351
  %374 = vmatprep.subr.bf16.mxu0 0
  %375 = vmatpush1.bf16.msra.mxu0 %v352
  %376 = vmatprep.subr.bf16.mxu0 0
  %377 = vmatpush1.bf16.msra.mxu0 %v353
  %378 = vmatprep.subr.bf16.mxu0 0
  %379 = vmatpush1.bf16.msra.mxu0 0
  %380 = vmatprep.subr.bf16.mxu0 0
  %381 = vmatpush1.bf16.msra.mxu0 0
  %382 = vmatprep.subr.bf16.mxu0 0
  %383 = vmatpush1.bf16.msra.mxu0 0
  %384 = vmatprep.subr.bf16.mxu0 0
  %385 = vmatpush1.bf16.msra.mxu0 0
  %386 = vmatprep.subr.bf16.mxu0 0
  %387 = vmatpush1.bf16.msra.mxu0 0
  %388 = vmatprep.subr.bf16.mxu0 0
  %389 = vmatpush1.bf16.msra.mxu0 0
  %390 = vmatprep.subr.bf16.mxu0 0
  %391 = vmatpush1.bf16.msra.mxu0 0
  %392 = vmatprep.subr.bf16.mxu0 0
  %393 = vmatpush1.bf16.msra.mxu0 0
  %394 = vmatprep.mubr.bf16.mxu0 0
  %395 = vmatmul.mubr.bf16.gmra.mrb[0].mxu0 %v290
  %v396 = vpop.f32.mrb[0].mxu0
  %v397 = vadd.f32 %v312, %v396
  %v398 = vpop.f32.mrb[0].mxu0
  %v399 = vpop.f32.mrb[0].mxu0
  %v400 = vadd.f32 %v312, %v399
  %v401 = vpop.f32.mrb[0].mxu0
  %402 = vdwg.mxu0
  %vm403 = vcmask 31744
  %404 = vst.msk [vmem:[%s7] sm:$0xff] %vm403, %v397
  %405 = vst.msk [vmem:[%s7 + $0x8] sm:$0xff] %vm403, %v400
  // Predicated region
  $region30: #{simple_agent_forward.1} parent=0 // pred_check
    _
  $region31: #{simple_agent_forward.1} parent=0 // pred_check_branch
    %407 = sbr.rel (0) target = $region33
  $region32: #{simple_agent_forward.1} parent=0 // pred_region
    _
  $region33: #{simple_agent_forward.1} parent=0 // pred_fallthru
    _
  // Predicated region
  $region34: #{simple_agent_forward.1} parent=0 // pred_check
    _
  $region35: #{simple_agent_forward.1} parent=0 // pred_check_branch
    %409 = sbr.rel (0) target = $region37
  $region36: #{simple_agent_forward.1} parent=0 // pred_region
    _
  $region37: #{simple_agent_forward.1} parent=0 // pred_fallthru
    _

</llo_original>
